<compile_context>
chip_gen: v7x
topology: tpu7x:2x2x1
jax: 0.10.0
libtpu: 0.0.40
codegen_flags: <defaults>
</compile_context>

<pallas_src>
import jax
import jax.numpy as jnp
from jax.experimental import pallas as pl
from jax.experimental.pallas import tpu as pltpu

EPS = 1e-12  # F.normalize default eps


def _l2norm_kernel(x_ref, o_ref):
    # Block: (bn, C, TILE_HW). Reduce over the channel axis (axis=1), f32 acc.
    sq = jnp.sum(jnp.square(x_ref[...].astype(jnp.float32)), axis=1, keepdims=True)
    # 1 / max(||x||, eps) == rsqrt(max(sq, eps^2)); one rsqrt per lane column.
    inv = jax.lax.rsqrt(jnp.maximum(sq, EPS * EPS))
    # Re-read x_ref for the scale instead of keeping the upcast tile alive
    # across the reduce: one fewer live f32 temporary per step.
    o_ref[...] = (x_ref[...].astype(jnp.float32) * inv).astype(o_ref.dtype)


def _physical_vmem_bytes() -> int:
    try:
        return int(pltpu.get_tpu_info().vmem_capacity_bytes)
    except Exception:
        return 64 * 1024 * 1024  # conservative fallback (v7x per-TC VMEM)


def _select_tiling(n, c, hw, itemsize, vmem_limit):
    """Pick (bn, tile_hw, num_tiles).

    tile_hw: multiple of 128, targeting ~vmem_limit/8 bytes per DMA buffer,
    with the pipeline (2x in + 2x out buffers + ~2 f32 temps) under
    vmem_limit/2.  bn: batch images folded per block so each grid step moves
    >= ~2 MiB of input (bounded by VMEM and by keeping grid parallelism).
    """
    hw128 = pl.cdiv(hw, 128) * 128
    # Per lane column: 4 DMA buffers (double-buffered in/out) + ~2 f32 temps.
    per_lane = c * (4 * itemsize + 2 * 4)
    budget_tile = max(1, (vmem_limit // 2) // per_lane)
    target_buf = min(8 * 1024 * 1024, max(1, vmem_limit // 8))
    target_tile = max(1, target_buf // max(c * itemsize, 1))
    tile_hw = min(budget_tile, target_tile, hw128)
    tile_hw = max(128, (tile_hw // 128) * 128)
    num_tiles = pl.cdiv(hw, tile_hw)

    # Batch folding: amortize per-step overhead when blocks are small, but
    # keep >= 4 parallel grid points when the problem allows it (v7x shards
    # "parallel" grid axes across its 2 TensorCores).
    step_bytes = c * tile_hw * itemsize
    want_bn = min(n, max(1, (2 * 1024 * 1024) // max(step_bytes, 1)))
    vmem_bn = max(1, (vmem_limit // 2) // max(per_lane * tile_hw, 1))
    want_bn = min(want_bn, vmem_bn)
    if n * num_tiles >= 4:
        want_bn = min(want_bn, max(1, (n * num_tiles) // 4))
    bn = 1
    for d in range(1, min(want_bn, n) + 1):  # bn divides n: no partial batch blocks
        if n % d == 0:
            bn = d

    # v7x megacore: with a tiny grid, prefer more / narrower lane tiles so
    # both TensorCores get work (no-op on v5e/v6e).
    while bn == 1 and num_tiles * n < 4 and tile_hw > 128:
        tile_hw = max(128, ((tile_hw // 2) // 128) * 128)
        num_tiles = pl.cdiv(hw, tile_hw)

    return bn, tile_hw, num_tiles


def l2norm(x: jax.Array, dim: int = 1) -> jax.Array:
    """L2-normalize `x` along `dim` (default: channel dim of NCHW)."""
    assert dim == 1, "kernel implemented for dim=1 (channel of NCHW)"
    n, c, h, w = x.shape
    hw = h * w
    itemsize = jnp.dtype(x.dtype).itemsize

    phys = _physical_vmem_bytes()
    # Scoped budget: nearly all of VMEM minus headroom for Mosaic scratch;
    # capped at 100 MiB on 128-MiB parts (v5e/v6e), ~48 MiB on v7x.
    vmem_limit = max(16 * 1024 * 1024, min(phys - (16 << 20), 100 * 1024 * 1024))

    bn, tile_hw, num_tiles = _select_tiling(n, c, hw, itemsize, vmem_limit)

    # Ensure the scoped limit covers the chosen footprint (with headroom) but
    # never exceeds physical VMEM (guards the 128-lane floor for huge C).
    footprint = bn * c * tile_hw * (4 * itemsize + 2 * 4)
    vmem_limit = min(max(vmem_limit, footprint + (8 << 20)), phys - (2 << 20))

    x3 = x.reshape(n, c, hw)  # zero-copy view; no padding, no post-slice

    out = pl.pallas_call(
        _l2norm_kernel,
        out_shape=jax.ShapeDtypeStruct((n, c, hw), x.dtype),
        grid_spec=pltpu.PrefetchScalarGridSpec(
            num_scalar_prefetch=0,
            grid=(n // bn, num_tiles),
            in_specs=[pl.BlockSpec((bn, c, tile_hw), lambda i, j: (i, 0, j))],
            out_specs=pl.BlockSpec((bn, c, tile_hw), lambda i, j: (i, 0, j)),
        ),
        compiler_params=pltpu.CompilerParams(
            dimension_semantics=("parallel", "parallel"),
            vmem_limit_bytes=int(vmem_limit),
        ),
        cost_estimate=pl.CostEstimate(
            flops=3 * n * c * hw,
            transcendentals=n * hw,
            bytes_accessed=2 * n * c * hw * itemsize,
        ),
    )(x3)

    return out.reshape(n, c, h, w)


def _l2norm_ref(x, dim=1):
    # Pure-JAX reference matching torch.nn.functional.normalize(p=2)
    norm = jnp.sqrt(jnp.sum(x.astype(jnp.float32) ** 2, axis=dim, keepdims=True))
    return (x.astype(jnp.float32) / jnp.maximum(norm, EPS)).astype(x.dtype)


if __name__ == "__main__":
    key = jax.random.PRNGKey(0)
    x = jax.random.normal(key, (2, 4, 16, 16), dtype=jnp.float32)

    y = jax.block_until_ready(l2norm(x, dim=1))
    y_ref = _l2norm_ref(x, dim=1)
    assert y.shape == x.shape and y.dtype == x.dtype
    assert jnp.allclose(y, y_ref, atol=1e-5, rtol=1e-5)

    # Exercise the partial final lane block (H*W not a multiple of 128): the
    # unpadded path must still match the reference exactly on valid columns.
    x2 = jax.random.normal(jax.random.PRNGKey(0), (1, 3, 9, 9), dtype=jnp.float32)
    y2 = jax.block_until_ready(l2norm(x2, dim=1))
    assert jnp.allclose(y2, _l2norm_ref(x2, dim=1), atol=1e-5, rtol=1e-5)

    print("KERNEL_OK")
</pallas_src>

<mosaic_0001>
module attributes {stable_mosaic.version = 11 : i64} {
  func.func @_l2norm_kernel(%arg0: i32, %arg1: i32, %arg2: memref<2x4x256xf32, #tpu.memory_space<vmem>>, %arg3: memref<2x4x256xf32, #tpu.memory_space<vmem>>) attributes {dimension_semantics = [#tpu.dimension_semantics<parallel>, #tpu.dimension_semantics<parallel>], iteration_bounds = array<i64: 1, 1>, scalar_prefetch = 0 : i64, scratch_operands = 0 : i64, tpu.core_type = #tpu.core_type<tc>, window_params = [{transform_indices = @transform_0, window_bounds = array<i64: 2, 4, 256>}, {transform_indices = @transform_1, window_bounds = array<i64: 2, 4, 256>}]} {
    %c0 = arith.constant 0 : index
    %c0_0 = arith.constant 0 : index
    %c0_1 = arith.constant 0 : index
    %0 = vector.load %arg2[%c0, %c0_0, %c0_1] : memref<2x4x256xf32, #tpu.memory_space<vmem>>, vector<2x4x256xf32>
    %1 = arith.mulf %0, %0 : vector<2x4x256xf32>
    %cst = arith.constant dense<0.000000e+00> : vector<2x256xf32>
    %2 = vector.multi_reduction <add>, %1, %cst [1] : vector<2x4x256xf32> to vector<2x256xf32>
    %3 = vector.shape_cast %2 : vector<2x256xf32> to vector<2x1x256xf32>
    %cst_2 = arith.constant 1.000000e-24 : f32
    %4 = vector.broadcast %cst_2 : f32 to vector<2x1x256xf32>
    %5 = arith.maximumf %3, %4 : vector<2x1x256xf32>
    %6 = math.rsqrt %5 : vector<2x1x256xf32>
    %c0_3 = arith.constant 0 : index
    %c0_4 = arith.constant 0 : index
    %c0_5 = arith.constant 0 : index
    %7 = vector.load %arg2[%c0_3, %c0_4, %c0_5] : memref<2x4x256xf32, #tpu.memory_space<vmem>>, vector<2x4x256xf32>
    %8 = vector.broadcast %6 : vector<2x1x256xf32> to vector<2x4x256xf32>
    %9 = arith.mulf %7, %8 : vector<2x4x256xf32>
    %c0_6 = arith.constant 0 : index
    %c0_7 = arith.constant 0 : index
    %c0_8 = arith.constant 0 : index
    %10 = vector.load %arg3[%c0_6, %c0_7, %c0_8] : memref<2x4x256xf32, #tpu.memory_space<vmem>>, vector<2x4x256xf32>
    tpu.vector_store %arg3[%c0_6, %c0_7, %c0_8], %9 {strides = array<i32>} : memref<2x4x256xf32, #tpu.memory_space<vmem>>, vector<2x4x256xf32>,
    return
  }
  func.func @transform_0(%arg0: i32, %arg1: i32) -> (i32, i32, i32) {
    %c0_i32 = arith.constant 0 : i32
    %c0_i32_0 = arith.constant 0 : i32
    return %arg0, %c0_i32, %arg1 : i32, i32, i32
  }
  func.func @transform_1(%arg0: i32, %arg1: i32) -> (i32, i32, i32) {
    %c0_i32 = arith.constant 0 : i32
    %c0_i32_0 = arith.constant 0 : i32
    return %arg0, %c0_i32, %arg1 : i32, i32, i32
  }
}

</mosaic_0001>

<llo_original>
// kernel: tpu_custom_call.1
$region0: #{tpu_custom_call.1}
  #allocation0 [shape = 'u32[]', space=smem, size = 0x4, offset = 0x4, fixed_abs, tag = 'smem constant byte address 0x4 - core index']
  #allocation1 [shape = 'u32[144,128]{1,0:T(1,128)}', space=vmem, size = 0x12000, scoped, tag = 'internal scratch']
  %s0 = inlined_call_operand.hbm [shape: f32[2,4,256], index: 0, kind: input, shape index: {}]
  %s1 = inlined_call_operand.hbm [shape: f32[2,4,256], index: 1, kind: output, shape index: {}]
  %s2 = sld [smem:[#allocation0]]
  $region18: #{tpu_custom_call.1} parent=0
    _
  %s4 = ssub.s32 1, %s2
  %s5 = scalar_select 0, %s4, %s2
  $region1: #{tpu_custom_call.1} parent=0
    #allocation2 [shape = 'u8[8192]{0}', space=vmem, size = 0x2000, scoped, tag = 'input window, operand 0, single buffered']
    #allocation3 [shape = 's32[1]{0}', space=sflag, size = 0x4, scoped, tag = 'scoped memory for tpu_custom_call.1']
    #allocation4 [shape = 's32[1]{0}', space=sflag, size = 0x4, scoped, tag = 'scoped memory for tpu_custom_call.1']
    #allocation5 [shape = 'u8[8192]{0}', space=vmem, size = 0x2000, scoped, tag = 'output window, operand 0, single buffered']
    %6 = vsyncpa [#allocation3], 0
    %7 = vsyncpa [#allocation4], 0
    // Predicated region
    $region2: #{tpu_custom_call.1} parent=1 // pred_check
      _
    $region3: #{tpu_custom_call.1} parent=1 // pred_check_branch
      %9 = sbr.rel (0) target = $region5
    $region4: #{tpu_custom_call.1} parent=1 // pred_region
      %s11 = ssub.s32 256, 256
      %12 = vsyncadd [#allocation3], %s11
      %s13 = sshll.u32 [#allocation2], 4
      %s14 = int_to_ptr.vmem [resolvable:$true] %s13
      %19 = dma.hbm_to_vmem [thread:$0]  %s0, 256, %s14, [#allocation3], 128, 128, 8
    $region5: #{tpu_custom_call.1} parent=1 // pred_fallthru
      _
    // Predicated region
    $region6: #{tpu_custom_call.1} parent=1 // pred_check
      _
    $region7: #{tpu_custom_call.1} parent=1 // pred_check_branch
      %21 = sbr.rel (0) target = $region9
    $region8: #{tpu_custom_call.1} parent=1 // pred_region
      %22 = dma.done [#allocation3], 256
    $region9: #{tpu_custom_call.1} parent=1 // pred_fallthru
      _
    %v23 = vld [vmem:[#allocation2] sm:$0xff]
    %v24 = vld [vmem:[#allocation2 + $0x8] sm:$0xff]
    %v25 = vmul.f32 %v23, %v23
    %v26 = vmul.f32 %v24, %v24
    %v29 = vcombine.high %v25, %v25
    %v30 = vcombine.high %v26, %v26
    %vm33 = vcmask 1043456
    %v34 = vsel %vm33, %v25, 0.0
    %v35 = vrot.slane %v34, 4
    %v36 = vadd.f32 %v34, %v35
    %v37 = vrot.slane %v36, 2
    %v38 = vadd.f32 %v36, %v37
    %v39 = vrot.slane %v38, 1
    %v40 = vadd.f32 %v38, %v39
    %v41 = vsel %vm33, %v29, 0.0
    %v42 = vrot.slane %v41, 4
    %v43 = vadd.f32 %v41, %v42
    %v44 = vrot.slane %v43, 2
    %v45 = vadd.f32 %v43, %v44
    %v46 = vrot.slane %v45, 1
    %v47 = vadd.f32 %v45, %v46
    %v48 = vsel %vm33, %v26, 0.0
    %v49 = vrot.slane %v48, 4
    %v50 = vadd.f32 %v48, %v49
    %v51 = vrot.slane %v50, 2
    %v52 = vadd.f32 %v50, %v51
    %v53 = vrot.slane %v52, 1
    %v54 = vadd.f32 %v52, %v53
    %v55 = vsel %vm33, %v30, 0.0
    %v56 = vrot.slane %v55, 4
    %v57 = vadd.f32 %v55, %v56
    %v58 = vrot.slane %v57, 2
    %v59 = vadd.f32 %v57, %v58
    %v60 = vrot.slane %v59, 1
    %v61 = vadd.f32 %v59, %v60
    %v62 = vmax.f32 %v40, 1e-24
    %v63 = vmax.f32 %v47, 1e-24
    %v64 = vmax.f32 %v54, 1e-24
    %v65 = vmax.f32 %v61, 1e-24
    %v66 = vrsqrt.pop %v62
    %v67 = vrsqrt.pop %v63
    %v68 = vrsqrt.pop %v64
    %v69 = vrsqrt.pop %v65
    %v74 = vcombine.low %v66, %v67
    %v75 = vcombine.low %v68, %v69
    %v78 = vmul.f32 %v23, %v74
    %v79 = vmul.f32 %v24, %v75
    %80 = vst [vmem:[#allocation5] sm:$0xff] %v78
    %81 = vst [vmem:[#allocation5 + $0x8] sm:$0xff] %v79
    // Predicated region
    $region10: #{tpu_custom_call.1} parent=1 // pred_check
      _
    $region11: #{tpu_custom_call.1} parent=1 // pred_check_branch
      %83 = sbr.rel (0) target = $region13
    $region12: #{tpu_custom_call.1} parent=1 // pred_region
      %s85 = ssub.s32 256, 256
      %86 = vsyncadd [#allocation4], %s85
      %s87 = sshll.u32 [#allocation5], 4
      %s88 = int_to_ptr.vmem [resolvable:$true] %s87
      %93 = dma.vmem_to_hbm [thread:$0]  %s88, 256, %s1, [#allocation4], 128, 128, 8
    $region13: #{tpu_custom_call.1} parent=1 // pred_fallthru
      _
    // Predicated region
    $region14: #{tpu_custom_call.1} parent=1 // pred_check
      _
    $region15: #{tpu_custom_call.1} parent=1 // pred_check_branch
      %95 = sbr.rel (0) target = $region17
    $region16: #{tpu_custom_call.1} parent=1 // pred_region
      %96 = dma.done [#allocation4], 256
    $region17: #{tpu_custom_call.1} parent=1 // pred_fallthru
      _
    %97 = vsyncpa [#allocation3], 1
    %98 = vsyncpa [#allocation4], 1

</llo_original>
